<compile_context>
chip_gen: v7x
topology: tpu7x:2x2x1
jax: 0.10.0
libtpu: 0.0.40
codegen_flags: <defaults>
</compile_context>

<pallas_src>
import jax
import jax.numpy as jnp
from jax.experimental import pallas as pl
from jax.experimental.pallas import tpu as pltpu

OUT_PAD = 128   # lane-dense padded width of the (logical 1-wide) critic output
MAX_TB = 512    # batch-tile rows per grid step for large batches


def critic_net_kernel(state_ref, action_ref,
                      w1s_ref, w1a_ref, b1_ref,
                      w2_ref, b2_ref,
                      w3_ref, b3_ref,
                      out_ref):
    # fc[0]+fc[1]: Linear(S + C*A, 2H) + ReLU, concat folded into two matmuls.
    x = (jnp.dot(state_ref[...], w1s_ref[...], preferred_element_type=jnp.float32)
         + jnp.dot(action_ref[...], w1a_ref[...], preferred_element_type=jnp.float32)
         + b1_ref[...])
    x = jnp.maximum(x, 0.0)

    # fc[2]+fc[3]: Linear(2H, H) + ReLU
    x = jnp.dot(x, w2_ref[...], preferred_element_type=jnp.float32) + b2_ref[...]
    x = jnp.maximum(x, 0.0)

    # fc[4]: Linear(H, 1), zero-padded to 128 lanes for a dense store.
    out_ref[...] = (jnp.dot(x, w3_ref[...], preferred_element_type=jnp.float32)
                    + b3_ref[...])


def critic_net_forward(state, action, params):
    """state: [B, S] f32, action: [B, C, A] f32. Returns [B, 1] f32."""
    B, S = state.shape
    action_flat = action.reshape(B, -1)          # torch: action.view(B, -1)
    FA = action_flat.shape[1]
    H2, H = params["w2"].shape                   # 2*hidden, hidden

    # Batch tile: one step for small B, MAX_TB-row tiles (multiple of 8) else.
    if B <= MAX_TB:
        tb = max(8, -(-B // 8) * 8)              # round B up to a multiple of 8
    else:
        tb = MAX_TB
    b_pad = -(-B // tb) * tb
    if b_pad != B:
        pad = b_pad - B
        state = jnp.pad(state, ((0, pad), (0, 0)))
        action_flat = jnp.pad(action_flat, ((0, pad), (0, 0)))

    def row_spec(cols):
        return pl.BlockSpec((tb, cols), lambda i: (i, 0))

    def full_spec(shape):
        return pl.BlockSpec(shape, lambda i: (0, 0))

    out = pl.pallas_call(
        critic_net_kernel,
        out_shape=jax.ShapeDtypeStruct((b_pad, OUT_PAD), jnp.float32),
        grid=(b_pad // tb,),
        in_specs=[
            row_spec(S),             # state tile
            row_spec(FA),            # flattened action tile
            full_spec((S, H2)),      # w1 (state half)
            full_spec((FA, H2)),     # w1 (action half)
            full_spec((1, H2)),      # b1
            full_spec((H2, H)),      # w2
            full_spec((1, H)),       # b2
            full_spec((H, OUT_PAD)), # w3 (lane-padded)
            full_spec((1, OUT_PAD)), # b3 (lane-padded)
        ],
        out_specs=row_spec(OUT_PAD),
        compiler_params=pltpu.CompilerParams(
            dimension_semantics=("parallel",)),
    )(state, action_flat,
      params["w1s"], params["w1a"], params["b1"],
      params["w2"], params["b2"],
      params["w3"], params["b3"])

    return out[:B, :1]


def init_params(key, state_dim, action_dim, hidden_dim):
    """Deterministic synthetic init mimicking PyTorch Linear default scaling."""
    C, A = action_dim
    flat_a = C * A
    keys = jax.random.split(key, 6)

    def lin(kw, kb, fan_in, fan_out):
        bound = 1.0 / jnp.sqrt(jnp.float32(fan_in))
        w = jax.random.uniform(kw, (fan_in, fan_out), jnp.float32, -bound, bound)
        b = jax.random.uniform(kb, (1, fan_out), jnp.float32, -bound, bound)
        return w, b

    # Linear(S + C*A, 2H): split along the input axis (fuses the concat away).
    w1, b1 = lin(keys[0], keys[1], state_dim + flat_a, 2 * hidden_dim)
    w1s, w1a = w1[:state_dim], w1[state_dim:]
    # Linear(2H, H)
    w2, b2 = lin(keys[2], keys[3], 2 * hidden_dim, hidden_dim)
    # Linear(H, 1), zero-padded to OUT_PAD lanes (only column 0 is real).
    w3_real, b3_real = lin(keys[4], keys[5], hidden_dim, 1)
    w3 = jnp.zeros((hidden_dim, OUT_PAD), jnp.float32).at[:, :1].set(w3_real)
    b3 = jnp.zeros((1, OUT_PAD), jnp.float32).at[:, :1].set(b3_real)

    return {"w1s": w1s, "w1a": w1a, "b1": b1,
            "w2": w2, "b2": b2, "w3": w3, "b3": b3}


if __name__ == "__main__":
    # Small, forward-consistent shapes:
    #   state_dim=32, hidden_dim=32, action_dim=(container_number=4, server_number+1=9)
    batch = 8
    state_dim = 32
    hidden_dim = 32
    action_dim = (4, 9)

    key = jax.random.PRNGKey(0)
    k_state, k_action, k_params = jax.random.split(key, 3)
    state = jax.random.normal(k_state, (batch, state_dim), jnp.float32)
    action = jax.random.normal(k_action, (batch,) + action_dim, jnp.float32)
    params = init_params(k_params, state_dim, action_dim, hidden_dim)

    out = critic_net_forward(state, action, params)
    out = jax.block_until_ready(out)

    assert out.shape == (batch, 1), out.shape
    assert bool(jnp.all(jnp.isfinite(out)))

    # Pure-JAX reference (cat + 3 Linears + 2 ReLUs), same params.
    w1_full = jnp.concatenate([params["w1s"], params["w1a"]], axis=0)
    x_cat = jnp.concatenate([state, action.reshape(batch, -1)], axis=1)
    ref = jnp.maximum(x_cat @ w1_full + params["b1"], 0.0)
    ref = jnp.maximum(ref @ params["w2"] + params["b2"], 0.0)
    ref = ref @ params["w3"][:, :1] + params["b3"][:, :1]
    assert jnp.allclose(out, ref, atol=1e-5, rtol=1e-5), \
        float(jnp.max(jnp.abs(out - ref)))

    print("KERNEL_OK")
</pallas_src>

<mosaic_0001>
module attributes {stable_mosaic.version = 11 : i64} {
  func.func @critic_net_kernel(%arg0: i32, %arg1: memref<8x32xf32, #tpu.memory_space<vmem>>, %arg2: memref<8x36xf32, #tpu.memory_space<vmem>>, %arg3: memref<32x64xf32, #tpu.memory_space<vmem>>, %arg4: memref<36x64xf32, #tpu.memory_space<vmem>>, %arg5: memref<1x64xf32, #tpu.memory_space<vmem>>, %arg6: memref<64x32xf32, #tpu.memory_space<vmem>>, %arg7: memref<1x32xf32, #tpu.memory_space<vmem>>, %arg8: memref<32x128xf32, #tpu.memory_space<vmem>>, %arg9: memref<1x128xf32, #tpu.memory_space<vmem>>, %arg10: memref<8x128xf32, #tpu.memory_space<vmem>>) attributes {dimension_semantics = [#tpu.dimension_semantics<parallel>], iteration_bounds = array<i64: 1>, scalar_prefetch = 0 : i64, scratch_operands = 0 : i64, tpu.core_type = #tpu.core_type<tc>, window_params = [{transform_indices = @transform_0, window_bounds = array<i64: 8, 32>}, {transform_indices = @transform_1, window_bounds = array<i64: 8, 36>}, {pipeline_mode = #tpu.pipeline_mode<synchronous>, transform_indices = @transform_2, window_bounds = array<i64: 32, 64>}, {pipeline_mode = #tpu.pipeline_mode<synchronous>, transform_indices = @transform_3, window_bounds = array<i64: 36, 64>}, {pipeline_mode = #tpu.pipeline_mode<synchronous>, transform_indices = @transform_4, window_bounds = array<i64: 1, 64>}, {pipeline_mode = #tpu.pipeline_mode<synchronous>, transform_indices = @transform_5, window_bounds = array<i64: 64, 32>}, {pipeline_mode = #tpu.pipeline_mode<synchronous>, transform_indices = @transform_6, window_bounds = array<i64: 1, 32>}, {pipeline_mode = #tpu.pipeline_mode<synchronous>, transform_indices = @transform_7, window_bounds = array<i64: 32, 128>}, {pipeline_mode = #tpu.pipeline_mode<synchronous>, transform_indices = @transform_8, window_bounds = array<i64: 1, 128>}, {transform_indices = @transform_9, window_bounds = array<i64: 8, 128>}]} {
    %c0 = arith.constant 0 : index
    %c0_0 = arith.constant 0 : index
    %0 = vector.load %arg1[%c0, %c0_0] : memref<8x32xf32, #tpu.memory_space<vmem>>, vector<8x32xf32>
    %c0_1 = arith.constant 0 : index
    %c0_2 = arith.constant 0 : index
    %1 = vector.load %arg3[%c0_1, %c0_2] : memref<32x64xf32, #tpu.memory_space<vmem>>, vector<32x64xf32>
    %cst = arith.constant dense<0.000000e+00> : vector<8x64xf32>
    %2 = tpu.matmul %0, %1, %cst {dimension_numbers = #tpu.dot_dimension_numbers<[1], [0], [0], [1], [0, 0, 1, 1], [], []>} : vector<8x32xf32>, vector<32x64xf32>, vector<8x64xf32> -> vector<8x64xf32>
    %c0_3 = arith.constant 0 : index
    %c0_4 = arith.constant 0 : index
    %3 = vector.load %arg2[%c0_3, %c0_4] : memref<8x36xf32, #tpu.memory_space<vmem>>, vector<8x36xf32>
    %c0_5 = arith.constant 0 : index
    %c0_6 = arith.constant 0 : index
    %4 = vector.load %arg4[%c0_5, %c0_6] : memref<36x64xf32, #tpu.memory_space<vmem>>, vector<36x64xf32>
    %cst_7 = arith.constant dense<0.000000e+00> : vector<8x64xf32>
    %5 = tpu.matmul %3, %4, %cst_7 {dimension_numbers = #tpu.dot_dimension_numbers<[1], [0], [0], [1], [0, 0, 1, 1], [], []>} : vector<8x36xf32>, vector<36x64xf32>, vector<8x64xf32> -> vector<8x64xf32>
    %6 = arith.addf %2, %5 : vector<8x64xf32>
    %c0_8 = arith.constant 0 : index
    %c0_9 = arith.constant 0 : index
    %7 = vector.load %arg5[%c0_8, %c0_9] : memref<1x64xf32, #tpu.memory_space<vmem>>, vector<1x64xf32>
    %8 = vector.broadcast %7 : vector<1x64xf32> to vector<8x64xf32>
    %9 = arith.addf %6, %8 : vector<8x64xf32>
    %cst_10 = arith.constant 0.000000e+00 : f32
    %10 = vector.broadcast %cst_10 : f32 to vector<8x64xf32>
    %11 = arith.maximumf %9, %10 : vector<8x64xf32>
    %c0_11 = arith.constant 0 : index
    %c0_12 = arith.constant 0 : index
    %12 = vector.load %arg6[%c0_11, %c0_12] : memref<64x32xf32, #tpu.memory_space<vmem>>, vector<64x32xf32>
    %cst_13 = arith.constant dense<0.000000e+00> : vector<8x32xf32>
    %13 = tpu.matmul %11, %12, %cst_13 {dimension_numbers = #tpu.dot_dimension_numbers<[1], [0], [0], [1], [0, 0, 1, 1], [], []>} : vector<8x64xf32>, vector<64x32xf32>, vector<8x32xf32> -> vector<8x32xf32>
    %c0_14 = arith.constant 0 : index
    %c0_15 = arith.constant 0 : index
    %14 = vector.load %arg7[%c0_14, %c0_15] : memref<1x32xf32, #tpu.memory_space<vmem>>, vector<1x32xf32>
    %15 = vector.broadcast %14 : vector<1x32xf32> to vector<8x32xf32>
    %16 = arith.addf %13, %15 : vector<8x32xf32>
    %cst_16 = arith.constant 0.000000e+00 : f32
    %17 = vector.broadcast %cst_16 : f32 to vector<8x32xf32>
    %18 = arith.maximumf %16, %17 : vector<8x32xf32>
    %c0_17 = arith.constant 0 : index
    %c0_18 = arith.constant 0 : index
    %19 = vector.load %arg8[%c0_17, %c0_18] : memref<32x128xf32, #tpu.memory_space<vmem>>, vector<32x128xf32>
    %cst_19 = arith.constant dense<0.000000e+00> : vector<8x128xf32>
    %20 = tpu.matmul %18, %19, %cst_19 {dimension_numbers = #tpu.dot_dimension_numbers<[1], [0], [0], [1], [0, 0, 1, 1], [], []>} : vector<8x32xf32>, vector<32x128xf32>, vector<8x128xf32> -> vector<8x128xf32>
    %c0_20 = arith.constant 0 : index
    %c0_21 = arith.constant 0 : index
    %21 = vector.load %arg9[%c0_20, %c0_21] : memref<1x128xf32, #tpu.memory_space<vmem>>, vector<1x128xf32>
    %22 = vector.broadcast %21 : vector<1x128xf32> to vector<8x128xf32>
    %23 = arith.addf %20, %22 : vector<8x128xf32>
    %c0_22 = arith.constant 0 : index
    %c0_23 = arith.constant 0 : index
    %24 = vector.load %arg10[%c0_22, %c0_23] : memref<8x128xf32, #tpu.memory_space<vmem>>, vector<8x128xf32>
    tpu.vector_store %arg10[%c0_22, %c0_23], %23 {strides = array<i32>} : memref<8x128xf32, #tpu.memory_space<vmem>>, vector<8x128xf32>,
    return
  }
  func.func @transform_0(%arg0: i32) -> (i32, i32) {
    %c0_i32 = arith.constant 0 : i32
    %c0_i32_0 = arith.constant 0 : i32
    return %arg0, %c0_i32 : i32, i32
  }
  func.func @transform_1(%arg0: i32) -> (i32, i32) {
    %c0_i32 = arith.constant 0 : i32
    %c0_i32_0 = arith.constant 0 : i32
    return %arg0, %c0_i32 : i32, i32
  }
  func.func @transform_2(%arg0: i32) -> (i32, i32) {
    %c0_i32 = arith.constant 0 : i32
    %c0_i32_0 = arith.constant 0 : i32
    %c0_i32_1 = arith.constant 0 : i32
    return %c0_i32, %c0_i32_0 : i32, i32
  }
  func.func @transform_3(%arg0: i32) -> (i32, i32) {
    %c0_i32 = arith.constant 0 : i32
    %c0_i32_0 = arith.constant 0 : i32
    %c0_i32_1 = arith.constant 0 : i32
    return %c0_i32, %c0_i32_0 : i32, i32
  }
  func.func @transform_4(%arg0: i32) -> (i32, i32) {
    %c0_i32 = arith.constant 0 : i32
    %c0_i32_0 = arith.constant 0 : i32
    %c0_i32_1 = arith.constant 0 : i32
    return %c0_i32, %c0_i32_0 : i32, i32
  }
  func.func @transform_5(%arg0: i32) -> (i32, i32) {
    %c0_i32 = arith.constant 0 : i32
    %c0_i32_0 = arith.constant 0 : i32
    %c0_i32_1 = arith.constant 0 : i32
    return %c0_i32, %c0_i32_0 : i32, i32
  }
  func.func @transform_6(%arg0: i32) -> (i32, i32) {
    %c0_i32 = arith.constant 0 : i32
    %c0_i32_0 = arith.constant 0 : i32
    %c0_i32_1 = arith.constant 0 : i32
    return %c0_i32, %c0_i32_0 : i32, i32
  }
  func.func @transform_7(%arg0: i32) -> (i32, i32) {
    %c0_i32 = arith.constant 0 : i32
    %c0_i32_0 = arith.constant 0 : i32
    %c0_i32_1 = arith.constant 0 : i32
    return %c0_i32, %c0_i32_0 : i32, i32
  }
  func.func @transform_8(%arg0: i32) -> (i32, i32) {
    %c0_i32 = arith.constant 0 : i32
    %c0_i32_0 = arith.constant 0 : i32
    %c0_i32_1 = arith.constant 0 : i32
    return %c0_i32, %c0_i32_0 : i32, i32
  }
  func.func @transform_9(%arg0: i32) -> (i32, i32) {
    %c0_i32 = arith.constant 0 : i32
    %c0_i32_0 = arith.constant 0 : i32
    return %arg0, %c0_i32 : i32, i32
  }
}

</mosaic_0001>

<llo_original>
// kernel: tpu_custom_call.1
$region0: #{tpu_custom_call.1}
  #allocation0 [shape = 'u32[]', space=smem, size = 0x4, offset = 0x4, fixed_abs, tag = 'smem constant byte address 0x4 - core index']
  #allocation1 [shape = 'u32[144,128]{1,0:T(1,128)}', space=vmem, size = 0x12000, scoped, tag = 'internal scratch']
  %s0 = inlined_call_operand.hbm [shape: f32[8,32], index: 0, kind: input, shape index: {}]
  %s1 = inlined_call_operand.hbm [shape: f32[8,36], index: 1, kind: input, shape index: {}]
  %s2 = inlined_call_operand.vmem [shape: f32[32,64], index: 2, kind: input, shape index: {}]
  %s3 = inlined_call_operand.vmem [shape: f32[36,64], index: 3, kind: input, shape index: {}]
  %s4 = inlined_call_operand.vmem [shape: f32[1,64], index: 4, kind: input, shape index: {}]
  %s5 = inlined_call_operand.vmem [shape: f32[64,32], index: 5, kind: input, shape index: {}]
  %s6 = inlined_call_operand.vmem [shape: f32[1,32], index: 6, kind: input, shape index: {}]
  %s7 = inlined_call_operand.vmem [shape: f32[32,128], index: 7, kind: input, shape index: {}]
  %s8 = inlined_call_operand.vmem [shape: f32[1,128], index: 8, kind: input, shape index: {}]
  %s9 = inlined_call_operand.hbm [shape: f32[8,128], index: 9, kind: output, shape index: {}]
  %s10 = sld [smem:[#allocation0]]
  $region54: #{tpu_custom_call.1} parent=0
    _
  %s12 = ssub.s32 1, %s10
  %s13 = scalar_select 0, %s12, %s10
  $region1: #{tpu_custom_call.1} parent=0
    #allocation2 [shape = 'u8[4096]{0}', space=vmem, size = 0x1000, scoped, tag = 'input window, operand 0, single buffered']
    #allocation3 [shape = 's32[1]{0}', space=sflag, size = 0x4, scoped, tag = 'scoped memory for tpu_custom_call.1']
    #allocation4 [shape = 's32[1]{0}', space=sflag, size = 0x4, scoped, tag = 'scoped memory for tpu_custom_call.1']
    #allocation5 [shape = 'u8[4096]{0}', space=vmem, size = 0x1000, scoped, tag = 'input window, operand 1, single buffered']
    #allocation6 [shape = 's32[1]{0}', space=sflag, size = 0x4, scoped, tag = 'scoped memory for tpu_custom_call.1']
    #allocation7 [shape = 'u8[4096]{0}', space=vmem, size = 0x1000, scoped, tag = 'output window, operand 0, single buffered']
    %14 = vsyncpa [#allocation3], 0
    %15 = vsyncpa [#allocation6], 0
    %16 = vsyncpa [#allocation4], 0
    // Predicated region
    $region2: #{tpu_custom_call.1} parent=1 // pred_check
      _
    $region3: #{tpu_custom_call.1} parent=1 // pred_check_branch
      %18 = sbr.rel (0) target = $region5
    $region4: #{tpu_custom_call.1} parent=1 // pred_region
      %s20 = ssub.s32 128, 128
      %21 = vsyncadd [#allocation3], %s20
      %s23 = sshll.u32 [#allocation2], 4
      %s24 = int_to_ptr.vmem [resolvable:$true] %s23
      %26 = dma.hbm_to_vmem [thread:$0]  %s0, 128, %s24, [#allocation3]
    $region5: #{tpu_custom_call.1} parent=1 // pred_fallthru
      _
    // Predicated region
    $region6: #{tpu_custom_call.1} parent=1 // pred_check
      _
    $region7: #{tpu_custom_call.1} parent=1 // pred_check_branch
      %28 = sbr.rel (0) target = $region9
    $region8: #{tpu_custom_call.1} parent=1 // pred_region
      %s30 = ssub.s32 128, 128
      %31 = vsyncadd [#allocation6], %s30
      %s33 = sshll.u32 [#allocation5], 4
      %s34 = int_to_ptr.vmem [resolvable:$true] %s33
      %36 = dma.hbm_to_vmem [thread:$0]  %s1, 128, %s34, [#allocation6]
    $region9: #{tpu_custom_call.1} parent=1 // pred_fallthru
      _
    // Predicated region
    $region10: #{tpu_custom_call.1} parent=1 // pred_check
      _
    $region11: #{tpu_custom_call.1} parent=1 // pred_check_branch
      %38 = sbr.rel (0) target = $region13
    $region12: #{tpu_custom_call.1} parent=1 // pred_region
      _
    $region13: #{tpu_custom_call.1} parent=1 // pred_fallthru
      _
    // Predicated region
    $region14: #{tpu_custom_call.1} parent=1 // pred_check
      _
    $region15: #{tpu_custom_call.1} parent=1 // pred_check_branch
      %40 = sbr.rel (0) target = $region17
    $region16: #{tpu_custom_call.1} parent=1 // pred_region
      _
    $region17: #{tpu_custom_call.1} parent=1 // pred_fallthru
      _
    // Predicated region
    $region18: #{tpu_custom_call.1} parent=1 // pred_check
      _
    $region19: #{tpu_custom_call.1} parent=1 // pred_check_branch
      %42 = sbr.rel (0) target = $region21
    $region20: #{tpu_custom_call.1} parent=1 // pred_region
      _
    $region21: #{tpu_custom_call.1} parent=1 // pred_fallthru
      _
    // Predicated region
    $region22: #{tpu_custom_call.1} parent=1 // pred_check
      _
    $region23: #{tpu_custom_call.1} parent=1 // pred_check_branch
      %44 = sbr.rel (0) target = $region25
    $region24: #{tpu_custom_call.1} parent=1 // pred_region
      _
    $region25: #{tpu_custom_call.1} parent=1 // pred_fallthru
      _
    // Predicated region
    $region26: #{tpu_custom_call.1} parent=1 // pred_check
      _
    $region27: #{tpu_custom_call.1} parent=1 // pred_check_branch
      %46 = sbr.rel (0) target = $region29
    $region28: #{tpu_custom_call.1} parent=1 // pred_region
      _
    $region29: #{tpu_custom_call.1} parent=1 // pred_fallthru
      _
    // Predicated region
    $region30: #{tpu_custom_call.1} parent=1 // pred_check
      _
    $region31: #{tpu_custom_call.1} parent=1 // pred_check_branch
      %48 = sbr.rel (0) target = $region33
    $region32: #{tpu_custom_call.1} parent=1 // pred_region
      _
    $region33: #{tpu_custom_call.1} parent=1 // pred_fallthru
      _
    // Predicated region
    $region34: #{tpu_custom_call.1} parent=1 // pred_check
      _
    $region35: #{tpu_custom_call.1} parent=1 // pred_check_branch
      %50 = sbr.rel (0) target = $region37
    $region36: #{tpu_custom_call.1} parent=1 // pred_region
      _
    $region37: #{tpu_custom_call.1} parent=1 // pred_fallthru
      _
    // Predicated region
    $region38: #{tpu_custom_call.1} parent=1 // pred_check
      _
    $region39: #{tpu_custom_call.1} parent=1 // pred_check_branch
      %52 = sbr.rel (0) target = $region41
    $region40: #{tpu_custom_call.1} parent=1 // pred_region
      %53 = dma.done [#allocation3], 128
    $region41: #{tpu_custom_call.1} parent=1 // pred_fallthru
      _
    // Predicated region
    $region42: #{tpu_custom_call.1} parent=1 // pred_check
      _
    $region43: #{tpu_custom_call.1} parent=1 // pred_check_branch
      %55 = sbr.rel (0) target = $region45
    $region44: #{tpu_custom_call.1} parent=1 // pred_region
      %56 = dma.done [#allocation6], 128
    $region45: #{tpu_custom_call.1} parent=1 // pred_fallthru
      _
    %v57 = vld [vmem:[#allocation2] sm:$0xff]
    %v58 = vld [vmem:[%s2] sm:$0xff]
    %v59 = vld [vmem:[%s2 + $0x8] sm:$0xff]
    %v60 = vld [vmem:[%s2 + $0x10] sm:$0xff]
    %v61 = vld [vmem:[%s2 + $0x18] sm:$0xff]
    %v62 = vld [vmem:[#allocation5] sm:$0xff]
    %v63 = vld [vmem:[%s3] sm:$0xff]
    %v64 = vld [vmem:[%s3 + $0x8] sm:$0xff]
    %v65 = vld [vmem:[%s3 + $0x10] sm:$0xff]
    %v66 = vld [vmem:[%s3 + $0x18] sm:$0xff]
    %v67 = vld [vmem:[%s3 + $0x20] sm:$0xf]
    %vm68 = vcmask 293888
    %v70 = vsel %vm68, %v62, 0
    %vm72 = vcmask 1043456
    %v74 = vsel %vm72, %v67, 0
    %76 = vmatprep.subr.mxu0 0.0
    %77 = vmatpush1.msra.mxu0 %v63
    %78 = vmatprep.subr.mxu0 0.0
    %79 = vmatpush1.msra.mxu0 %v64
    %80 = vmatprep.subr.mxu0 0.0
    %81 = vmatpush1.msra.mxu0 %v65
    %82 = vmatprep.subr.mxu0 0.0
    %83 = vmatpush1.msra.mxu0 %v66
    %84 = vmatprep.subr.mxu0 0.0
    %85 = vmatpush1.msra.mxu0 %v74
    %86 = vmatprep.subr.mxu0 0.0
    %87 = vmatpush1.msra.mxu0 0.0
    %88 = vmatprep.subr.mxu0 0.0
    %89 = vmatpush1.msra.mxu0 0.0
    %90 = vmatprep.subr.mxu0 0.0
    %91 = vmatpush1.msra.mxu0 0.0
    %92 = vmatprep.subr.mxu0 0.0
    %93 = vmatpush1.msra.mxu0 0.0
    %94 = vmatprep.subr.mxu0 0.0
    %95 = vmatpush1.msra.mxu0 0.0
    %96 = vmatprep.subr.mxu0 0.0
    %97 = vmatpush1.msra.mxu0 0.0
    %98 = vmatprep.subr.mxu0 0.0
    %99 = vmatpush1.msra.mxu0 0.0
    %100 = vmatprep.subr.mxu0 0.0
    %101 = vmatpush1.msra.mxu0 0.0
    %102 = vmatprep.subr.mxu0 0.0
    %103 = vmatpush1.msra.mxu0 0.0
    %104 = vmatprep.subr.mxu0 0.0
    %105 = vmatpush1.msra.mxu0 0.0
    %106 = vmatprep.subr.mxu0 0.0
    %107 = vmatpush1.msra.mxu0 0.0
    %108 = vmatprep.subr.mxu0 0.0
    %109 = vmatpush1.msra.mxu0 0.0
    %110 = vmatprep.subr.mxu0 0.0
    %111 = vmatpush1.msra.mxu0 0.0
    %112 = vmatprep.subr.mxu0 0.0
    %113 = vmatpush1.msra.mxu0 0.0
    %114 = vmatprep.subr.mxu0 0.0
    %115 = vmatpush1.msra.mxu0 0.0
    %116 = vmatprep.subr.mxu0 0.0
    %117 = vmatpush1.msra.mxu0 0.0
    %118 = vmatprep.subr.mxu0 0.0
    %119 = vmatpush1.msra.mxu0 0.0
    %120 = vmatprep.subr.mxu0 0.0
    %121 = vmatpush1.msra.mxu0 0.0
    %122 = vmatprep.subr.mxu0 0.0
    %123 = vmatpush1.msra.mxu0 0.0
    %124 = vmatprep.subr.mxu0 0.0
    %125 = vmatpush1.msra.mxu0 0.0
    %126 = vmatprep.subr.mxu0 0.0
    %127 = vmatpush1.msra.mxu0 0.0
    %128 = vmatprep.subr.mxu0 0.0
    %129 = vmatpush1.msra.mxu0 0.0
    %130 = vmatprep.subr.mxu0 0.0
    %131 = vmatpush1.msra.mxu0 0.0
    %132 = vmatprep.subr.mxu0 0.0
    %133 = vmatpush1.msra.mxu0 0.0
    %134 = vmatprep.subr.mxu0 0.0
    %135 = vmatpush1.msra.mxu0 0.0
    %136 = vmatprep.subr.mxu0 0.0
    %137 = vmatpush1.msra.mxu0 0.0
    %138 = vmatprep.subr.mxu0 0.0
    %139 = vmatpush1.msra.mxu0 0.0
    %140 = vmatprep.mubr.f32.mxu0 0.0
    %141 = vmatmul.mubr.f32.gmra.mrb[0].mxu0 %v70
    %v142 = vpop.f32.mrb[0].mxu0
    %v143 = vadd.f32 0.0, %v142
    %v144 = vpop.f32.mrb[0].mxu0
    %145 = vdwg.mxu0
    %vm146 = vcmask 261120
    %v148 = vsel %vm146, %v57, 0
    %150 = vmatprep.subr.mxu0 0.0
    %151 = vmatpush1.msra.mxu0 %v58
    %152 = vmatprep.subr.mxu0 0.0
    %153 = vmatpush1.msra.mxu0 %v59
    %154 = vmatprep.subr.mxu0 0.0
    %155 = vmatpush1.msra.mxu0 %v60
    %156 = vmatprep.subr.mxu0 0.0
    %157 = vmatpush1.msra.mxu0 %v61
    %158 = vmatprep.subr.mxu0 0.0
    %159 = vmatpush1.msra.mxu0 0.0
    %160 = vmatprep.subr.mxu0 0.0
    %161 = vmatpush1.msra.mxu0 0.0
    %162 = vmatprep.subr.mxu0 0.0
    %163 = vmatpush1.msra.mxu0 0.0
    %164 = vmatprep.subr.mxu0 0.0
    %165 = vmatpush1.msra.mxu0 0.0
    %166 = vmatprep.subr.mxu0 0.0
    %167 = vmatpush1.msra.mxu0 0.0
    %168 = vmatprep.subr.mxu0 0.0
    %169 = vmatpush1.msra.mxu0 0.0
    %170 = vmatprep.subr.mxu0 0.0
    %171 = vmatpush1.msra.mxu0 0.0
    %172 = vmatprep.subr.mxu0 0.0
    %173 = vmatpush1.msra.mxu0 0.0
    %174 = vmatprep.subr.mxu0 0.0
    %175 = vmatpush1.msra.mxu0 0.0
    %176 = vmatprep.subr.mxu0 0.0
    %177 = vmatpush1.msra.mxu0 0.0
    %178 = vmatprep.subr.mxu0 0.0
    %179 = vmatpush1.msra.mxu0 0.0
    %180 = vmatprep.subr.mxu0 0.0
    %181 = vmatpush1.msra.mxu0 0.0
    %182 = vmatprep.subr.mxu0 0.0
    %183 = vmatpush1.msra.mxu0 0.0
    %184 = vmatprep.subr.mxu0 0.0
    %185 = vmatpush1.msra.mxu0 0.0
    %186 = vmatprep.subr.mxu0 0.0
    %187 = vmatpush1.msra.mxu0 0.0
    %188 = vmatprep.subr.mxu0 0.0
    %189 = vmatpush1.msra.mxu0 0.0
    %190 = vmatprep.subr.mxu0 0.0
    %191 = vmatpush1.msra.mxu0 0.0
    %192 = vmatprep.subr.mxu0 0.0
    %193 = vmatpush1.msra.mxu0 0.0
    %194 = vmatprep.subr.mxu0 0.0
    %195 = vmatpush1.msra.mxu0 0.0
    %196 = vmatprep.subr.mxu0 0.0
    %197 = vmatpush1.msra.mxu0 0.0
    %198 = vmatprep.subr.mxu0 0.0
    %199 = vmatpush1.msra.mxu0 0.0
    %200 = vmatprep.subr.mxu0 0.0
    %201 = vmatpush1.msra.mxu0 0.0
    %202 = vmatprep.subr.mxu0 0.0
    %203 = vmatpush1.msra.mxu0 0.0
    %204 = vmatprep.subr.mxu0 0.0
    %205 = vmatpush1.msra.mxu0 0.0
    %206 = vmatprep.subr.mxu0 0.0
    %207 = vmatpush1.msra.mxu0 0.0
    %208 = vmatprep.subr.mxu0 0.0
    %209 = vmatpush1.msra.mxu0 0.0
    %210 = vmatprep.subr.mxu0 0.0
    %211 = vmatpush1.msra.mxu0 0.0
    %212 = vmatprep.subr.mxu0 0.0
    %213 = vmatpush1.msra.mxu0 0.0
    %214 = vmatprep.mubr.f32.mxu0 0.0
    %215 = vmatmul.mubr.f32.gmra.mrb[0].mxu0 %v148
    %v216 = vpop.f32.mrb[0].mxu0
    %v217 = vadd.f32 %v143, %v216
    %v218 = vpop.f32.mrb[0].mxu0
    %219 = vdwg.mxu0
    %v220 = vld [vmem:[%s4] sm:$0x1]
    %v222 = vlaneseq
    %v223 = vshrl.u32 %v222, 7
    %v224 = vsub.s32 0, %v223
    %v225 = vrot.slane %v220, %v224
    %v227 = vadd.f32 %v217, %v225
    %v228 = vmax.f32 %v227, 0.0
    %v229 = vld [vmem:[%s5] sm:$0xff]
    %v230 = vld [vmem:[%s5 + $0x8] sm:$0xff]
    %v231 = vld [vmem:[%s5 + $0x10] sm:$0xff]
    %v232 = vld [vmem:[%s5 + $0x18] sm:$0xff]
    %v233 = vld [vmem:[%s5 + $0x20] sm:$0xff]
    %v234 = vld [vmem:[%s5 + $0x28] sm:$0xff]
    %v235 = vld [vmem:[%s5 + $0x30] sm:$0xff]
    %v236 = vld [vmem:[%s5 + $0x38] sm:$0xff]
    %v237 = vld [vmem:[%s6] sm:$0x1]
    %v239 = vlaneseq
    %v240 = vshrl.u32 %v239, 7
    %v241 = vsub.s32 0, %v240
    %v242 = vrot.slane %v237, %v241
    %vm244 = vcmask 523264
    %v246 = vsel %vm244, %v228, 0
    %248 = vmatprep.subr.mxu0 0.0
    %249 = vmatpush1.msra.mxu0 %v229
    %250 = vmatprep.subr.mxu0 0.0
    %251 = vmatpush1.msra.mxu0 %v230
    %252 = vmatprep.subr.mxu0 0.0
    %253 = vmatpush1.msra.mxu0 %v231
    %254 = vmatprep.subr.mxu0 0.0
    %255 = vmatpush1.msra.mxu0 %v232
    %256 = vmatprep.subr.mxu0 0.0
    %257 = vmatpush1.msra.mxu0 %v233
    %258 = vmatprep.subr.mxu0 0.0
    %259 = vmatpush1.msra.mxu0 %v234
    %260 = vmatprep.subr.mxu0 0.0
    %261 = vmatpush1.msra.mxu0 %v235
    %262 = vmatprep.subr.mxu0 0.0
    %263 = vmatpush1.msra.mxu0 %v236
    %264 = vmatprep.subr.mxu0 0.0
    %265 = vmatpush1.msra.mxu0 0.0
    %266 = vmatprep.subr.mxu0 0.0
    %267 = vmatpush1.msra.mxu0 0.0
    %268 = vmatprep.subr.mxu0 0.0
    %269 = vmatpush1.msra.mxu0 0.0
    %270 = vmatprep.subr.mxu0 0.0
    %271 = vmatpush1.msra.mxu0 0.0
    %272 = vmatprep.subr.mxu0 0.0
    %273 = vmatpush1.msra.mxu0 0.0
    %274 = vmatprep.subr.mxu0 0.0
    %275 = vmatpush1.msra.mxu0 0.0
    %276 = vmatprep.subr.mxu0 0.0
    %277 = vmatpush1.msra.mxu0 0.0
    %278 = vmatprep.subr.mxu0 0.0
    %279 = vmatpush1.msra.mxu0 0.0
    %280 = vmatprep.subr.mxu0 0.0
    %281 = vmatpush1.msra.mxu0 0.0
    %282 = vmatprep.subr.mxu0 0.0
    %283 = vmatpush1.msra.mxu0 0.0
    %284 = vmatprep.subr.mxu0 0.0
    %285 = vmatpush1.msra.mxu0 0.0
    %286 = vmatprep.subr.mxu0 0.0
    %287 = vmatpush1.msra.mxu0 0.0
    %288 = vmatprep.subr.mxu0 0.0
    %289 = vmatpush1.msra.mxu0 0.0
    %290 = vmatprep.subr.mxu0 0.0
    %291 = vmatpush1.msra.mxu0 0.0
    %292 = vmatprep.subr.mxu0 0.0
    %293 = vmatpush1.msra.mxu0 0.0
    %294 = vmatprep.subr.mxu0 0.0
    %295 = vmatpush1.msra.mxu0 0.0
    %296 = vmatprep.subr.mxu0 0.0
    %297 = vmatpush1.msra.mxu0 0.0
    %298 = vmatprep.subr.mxu0 0.0
    %299 = vmatpush1.msra.mxu0 0.0
    %300 = vmatprep.subr.mxu0 0.0
    %301 = vmatpush1.msra.mxu0 0.0
    %302 = vmatprep.subr.mxu0 0.0
    %303 = vmatpush1.msra.mxu0 0.0
    %304 = vmatprep.subr.mxu0 0.0
    %305 = vmatpush1.msra.mxu0 0.0
    %306 = vmatprep.subr.mxu0 0.0
    %307 = vmatpush1.msra.mxu0 0.0
    %308 = vmatprep.subr.mxu0 0.0
    %309 = vmatpush1.msra.mxu0 0.0
    %310 = vmatprep.subr.mxu0 0.0
    %311 = vmatpush1.msra.mxu0 0.0
    %312 = vmatprep.mubr.f32.mxu0 0.0
    %313 = vmatmul.mubr.f32.gmra.mrb[0].mxu0 %v246
    %v314 = vpop.f32.mrb[0].mxu0
    %v315 = vadd.f32 %v242, %v314
    %v316 = vpop.f32.mrb[0].mxu0
    %317 = vdwg.mxu0
    %v318 = vmax.f32 %v315, 0.0
    %v319 = vld [vmem:[%s7] sm:$0xff]
    %v320 = vld [vmem:[%s7 + $0x8] sm:$0xff]
    %v321 = vld [vmem:[%s7 + $0x10] sm:$0xff]
    %v322 = vld [vmem:[%s7 + $0x18] sm:$0xff]
    %v323 = vld [vmem:[%s8] sm:$0x1]
    %v325 = vlaneseq
    %v326 = vshrl.u32 %v325, 7
    %v327 = vsub.s32 0, %v326
    %v328 = vrot.slane %v323, %v327
    %v331 = vsel %vm146, %v318, 0
    %333 = vmatprep.subr.mxu0 0.0
    %334 = vmatpush1.msra.mxu0 %v319
    %335 = vmatprep.subr.mxu0 0.0
    %336 = vmatpush1.msra.mxu0 %v320
    %337 = vmatprep.subr.mxu0 0.0
    %338 = vmatpush1.msra.mxu0 %v321
    %339 = vmatprep.subr.mxu0 0.0
    %340 = vmatpush1.msra.mxu0 %v322
    %341 = vmatprep.subr.mxu0 0.0
    %342 = vmatpush1.msra.mxu0 0.0
    %343 = vmatprep.subr.mxu0 0.0
    %344 = vmatpush1.msra.mxu0 0.0
    %345 = vmatprep.subr.mxu0 0.0
    %346 = vmatpush1.msra.mxu0 0.0
    %347 = vmatprep.subr.mxu0 0.0
    %348 = vmatpush1.msra.mxu0 0.0
    %349 = vmatprep.subr.mxu0 0.0
    %350 = vmatpush1.msra.mxu0 0.0
    %351 = vmatprep.subr.mxu0 0.0
    %352 = vmatpush1.msra.mxu0 0.0
    %353 = vmatprep.subr.mxu0 0.0
    %354 = vmatpush1.msra.mxu0 0.0
    %355 = vmatprep.subr.mxu0 0.0
    %356 = vmatpush1.msra.mxu0 0.0
    %357 = vmatprep.subr.mxu0 0.0
    %358 = vmatpush1.msra.mxu0 0.0
    %359 = vmatprep.subr.mxu0 0.0
    %360 = vmatpush1.msra.mxu0 0.0
    %361 = vmatprep.subr.mxu0 0.0
    %362 = vmatpush1.msra.mxu0 0.0
    %363 = vmatprep.subr.mxu0 0.0
    %364 = vmatpush1.msra.mxu0 0.0
    %365 = vmatprep.subr.mxu0 0.0
    %366 = vmatpush1.msra.mxu0 0.0
    %367 = vmatprep.subr.mxu0 0.0
    %368 = vmatpush1.msra.mxu0 0.0
    %369 = vmatprep.subr.mxu0 0.0
    %370 = vmatpush1.msra.mxu0 0.0
    %371 = vmatprep.subr.mxu0 0.0
    %372 = vmatpush1.msra.mxu0 0.0
    %373 = vmatprep.subr.mxu0 0.0
    %374 = vmatpush1.msra.mxu0 0.0
    %375 = vmatprep.subr.mxu0 0.0
    %376 = vmatpush1.msra.mxu0 0.0
    %377 = vmatprep.subr.mxu0 0.0
    %378 = vmatpush1.msra.mxu0 0.0
    %379 = vmatprep.subr.mxu0 0.0
    %380 = vmatpush1.msra.mxu0 0.0
    %381 = vmatprep.subr.mxu0 0.0
    %382 = vmatpush1.msra.mxu0 0.0
    %383 = vmatprep.subr.mxu0 0.0
    %384 = vmatpush1.msra.mxu0 0.0
    %385 = vmatprep.subr.mxu0 0.0
    %386 = vmatpush1.msra.mxu0 0.0
    %387 = vmatprep.subr.mxu0 0.0
    %388 = vmatpush1.msra.mxu0 0.0
    %389 = vmatprep.subr.mxu0 0.0
    %390 = vmatpush1.msra.mxu0 0.0
    %391 = vmatprep.subr.mxu0 0.0
    %392 = vmatpush1.msra.mxu0 0.0
    %393 = vmatprep.subr.mxu0 0.0
    %394 = vmatpush1.msra.mxu0 0.0
    %395 = vmatprep.subr.mxu0 0.0
    %396 = vmatpush1.msra.mxu0 0.0
    %397 = vmatprep.mubr.f32.mxu0 0.0
    %398 = vmatmul.mubr.f32.gmra.mrb[0].mxu0 %v331
    %v399 = vpop.f32.mrb[0].mxu0
    %v400 = vadd.f32 %v328, %v399
    %v401 = vpop.f32.mrb[0].mxu0
    %402 = vdwg.mxu0
    %403 = vst [vmem:[#allocation7] sm:$0xff] %v400
    // Predicated region
    $region46: #{tpu_custom_call.1} parent=1 // pred_check
      _
    $region47: #{tpu_custom_call.1} parent=1 // pred_check_branch
      %405 = sbr.rel (0) target = $region49
    $region48: #{tpu_custom_call.1} parent=1 // pred_region
      %s407 = ssub.s32 128, 128
      %408 = vsyncadd [#allocation4], %s407
      %s410 = sshll.u32 [#allocation7], 4
      %s411 = int_to_ptr.vmem [resolvable:$true] %s410
      %413 = dma.vmem_to_hbm [thread:$0]  %s411, 128, %s9, [#allocation4]
    $region49: #{tpu_custom_call.1} parent=1 // pred_fallthru
      _
    // Predicated region
    $region50: #{tpu_custom_call.1} parent=1 // pred_check
      _
    $region51: #{tpu_custom_call.1} parent=1 // pred_check_branch
      %415 = sbr.rel (0) target = $region53
    $region52: #{tpu_custom_call.1} parent=1 // pred_region
      %416 = dma.done [#allocation4], 128
    $region53: #{tpu_custom_call.1} parent=1 // pred_fallthru
      _
    %417 = vsyncpa [#allocation3], 1
    %418 = vsyncpa [#allocation6], 1
    %419 = vsyncpa [#allocation4], 1

</llo_original>
